<compile_context>
chip_gen: v5e
topology: v5e:2x2
jax: 0.10.0
libtpu: 0.0.40
codegen_flags: <defaults>
</compile_context>

<pallas_src>
import numpy as np
import jax
import jax.numpy as jnp
from jax.experimental import pallas as pl
from jax.experimental.pallas import tpu as pltpu


LANE = 128


def _round_up(x, m):
    return ((x + m - 1) // m) * m


# -----------------------------------------------------------------------------
# Kernel
# -----------------------------------------------------------------------------
def embed_mlp_kernel(dims_ref, offs_ref,            # scalar-prefetch (SMEM)
                     idx_ref, cont_ref,
                     fused1_ref, wcont1_ref, b1_ref,
                     w2_ref, b2_ref, w3_ref, b3_ref,
                     out_ref):
    TB, F = idx_ref.shape
    Vtot = fused1_ref.shape[0]

    # Multi-hot over the flat fused vocabulary.  For each feature:
    #   row = offset[f] + clamp(idx, dim[f])        (clamp == torch's np.where)
    # Features occupy disjoint row ranges, so summing the one-hots gives a
    # multi-hot whose single matmul against the fused table equals
    # sum_f (embedding_f @ w_cat_f @ w1_cat_f)  ==  layer-1 categorical term.
    lane_iota = jax.lax.broadcasted_iota(jnp.int32, (TB, Vtot), 1)
    mhot = jnp.zeros((TB, Vtot), jnp.bfloat16)
    for f in range(F):                               # F static & small
        row = jnp.minimum(idx_ref[:, f:f + 1], dims_ref[f]) + offs_ref[f]
        mhot = mhot + (lane_iota == row).astype(jnp.bfloat16)

    # Layer 1 (categorical + continuous + fused bias), then ReLU.
    h = (jnp.dot(mhot, fused1_ref[...], preferred_element_type=jnp.float32)
         + jnp.dot(cont_ref[...].astype(jnp.bfloat16), wcont1_ref[...],
                   preferred_element_type=jnp.float32)
         + b1_ref[...])
    h = jnp.maximum(h, 0.0)

    # Layer 2 + ReLU, output layer.
    h = jnp.maximum(jnp.dot(h.astype(jnp.bfloat16), w2_ref[...],
                            preferred_element_type=jnp.float32)
                    + b2_ref[...], 0.0)
    out_ref[...] = (jnp.dot(h.astype(jnp.bfloat16), w3_ref[...],
                            preferred_element_type=jnp.float32)
                    + b3_ref[...]).astype(out_ref.dtype)


# -----------------------------------------------------------------------------
# Wrapper
# -----------------------------------------------------------------------------
def embed_mlp_forward(kp, cat_idx, continuous, *, tb=256):
    """cat_idx: (B, F) int32 raw indices; continuous: (B, C) float32."""
    B, F = cat_idx.shape
    C = continuous.shape[1]
    O = kp["O"]
    Op = kp["b_out"].shape[1]
    H1p = kp["b1"].shape[1]
    H2p = kp["b2"].shape[1]
    Vtot_p = kp["fused1"].shape[0]

    TB = min(tb, _round_up(B, 8))
    Bp = _round_up(B, TB)

    idx_p = jnp.zeros((Bp, F), jnp.int32).at[:B].set(cat_idx.astype(jnp.int32))
    cont_p = jnp.zeros((Bp, C), jnp.float32).at[:B].set(
        continuous.astype(jnp.float32))

    grid = (Bp // TB,)
    full = lambda i, *_: (0, 0)      # weights stay resident across batch tiles
    batched = lambda i, *_: (i, 0)   # activations tiled along the batch axis

    in_specs = [
        pl.BlockSpec((TB, F), batched),          # idx
        pl.BlockSpec((TB, C), batched),          # continuous
        pl.BlockSpec((Vtot_p, H1p), full),       # fused1 = table@w_cat@w1a, bf16
        pl.BlockSpec((C, H1p), full),            # wcont1 = w_cont@w1b, bf16
        pl.BlockSpec((1, H1p), full),            # b1 (fused with b_cat, b_cont)
        pl.BlockSpec((H1p, H2p), full),          # w2
        pl.BlockSpec((1, H2p), full),            # b2
        pl.BlockSpec((H2p, Op), full),           # w_out
        pl.BlockSpec((1, Op), full),             # b_out
    ]
    out_specs = pl.BlockSpec((TB, Op), batched)

    weight_keys = ("fused1", "wcont1", "b1", "w2", "b2", "w_out", "b_out")
    flops = 2 * Bp * (Vtot_p * H1p + C * H1p + H1p * H2p + H2p * Op)
    bytes_accessed = (idx_p.size * 4 + cont_p.size * 4 + Bp * Op * 4
                      + sum(int(np.prod(kp[k].shape)) * np.dtype(kp[k].dtype).itemsize
                            for k in weight_keys))
    cost = pl.CostEstimate(flops=int(flops), transcendentals=0,
                           bytes_accessed=int(bytes_accessed))

    out = pl.pallas_call(
        embed_mlp_kernel,
        out_shape=jax.ShapeDtypeStruct((Bp, Op), jnp.float32),
        grid_spec=pltpu.PrefetchScalarGridSpec(
            num_scalar_prefetch=2,               # dims, offsets -> SMEM
            grid=grid,
            in_specs=in_specs,
            out_specs=out_specs,
        ),
        compiler_params=pltpu.CompilerParams(
            dimension_semantics=("parallel",),   # batch tiles independent
            vmem_limit_bytes=32 * 1024 * 1024,
        ),
        cost_estimate=cost,
    )(kp["dims"], kp["offs"], idx_p, cont_p, kp["fused1"], kp["wcont1"],
      kp["b1"], kp["w2"], kp["b2"], kp["w_out"], kp["b_out"])

    return out[:B, :O]


# -----------------------------------------------------------------------------
# Parameter construction (master f32 params + kernel-layout params)
# -----------------------------------------------------------------------------
def init_params(key, categorical_dims, continuous_dims, hidden_sizes,
                output_size, embedding_dim):
    assert len(hidden_sizes) == 2, "this synthetic kernel fixes 2 hidden layers"
    feats = list(categorical_dims.keys())
    F, E, O = len(feats), embedding_dim, output_size
    H1, H2 = hidden_sizes
    C = continuous_dims

    ks = jax.random.split(key, 12)

    tables = []
    for i, f in enumerate(feats):
        v = categorical_dims[f] + 1                       # +1 OOV row
        t = jax.random.normal(ks[i % 4], (v, E), jnp.float32) * 0.1 + 0.01 * i
        tables.append(np.asarray(t))

    def lin(k, fan_in, fan_out):
        w = jax.random.normal(k, (fan_in, fan_out), jnp.float32) * 0.1
        b = jax.random.normal(jax.random.fold_in(k, 1), (1, fan_out),
                              jnp.float32) * 0.1
        return np.asarray(w), np.asarray(b)

    w_cat, b_cat = lin(ks[4], F * E, O)
    w_cont, b_cont = lin(ks[5], C, O)
    w1, b1 = lin(ks[6], 2 * O, H1)
    w2, b2 = lin(ks[7], H1, H2)
    w_out, b_out = lin(ks[8], H2, O)

    master = dict(
        feats=feats,
        dims=np.array([categorical_dims[f] for f in feats], np.int32),
        tables=tables, w_cat=w_cat, b_cat=b_cat,
        w_cont=w_cont, b_cont=b_cont,
        w1=w1, b1=b1, w2=w2, b2=b2, w_out=w_out, b_out=b_out,
    )
    return master


def build_kernel_params(master):
    feats = master["feats"]
    F = len(feats)
    tables = master["tables"]
    E = tables[0].shape[1]
    O = master["b_cat"].shape[1]
    H1 = master["b1"].shape[1]
    H2 = master["b2"].shape[1]
    C = master["w_cont"].shape[0]

    Op, H1p, H2p = (_round_up(x, LANE) for x in (O, H1, H2))

    vocabs = [t.shape[0] for t in tables]
    offs = np.concatenate([[0], np.cumsum(vocabs)[:-1]]).astype(np.int32)
    Vtot = int(sum(vocabs))
    Vtot_p = _round_up(Vtot, LANE)

    w1 = master["w1"]                      # (2O, H1)
    w1a = w1[:O, :]                        # categorical half
    w1b = w1[O:, :]                        # continuous half

    # Fuse table[f] @ w_cat[f] @ w1a into a flat (Vtot_p, H1p) matrix (f32
    # precompute, zero-padded, stored bf16).
    fused1 = np.zeros((Vtot_p, H1p), np.float32)
    for f in range(F):
        wc = master["w_cat"][f * E:(f + 1) * E, :]        # (E, O)
        fused1[offs[f]:offs[f] + vocabs[f], :H1] = tables[f] @ wc @ w1a

    # Continuous branch folded through layer 1.
    wcont1 = np.zeros((C, H1p), np.float32)
    wcont1[:, :H1] = master["w_cont"] @ w1b               # (C, H1)

    # Layer-1 bias absorbs the categorical/continuous linear biases.
    b1_fused = np.zeros((1, H1p), np.float32)
    b1_fused[:, :H1] = (master["b1"]
                        + master["b_cat"] @ w1a
                        + master["b_cont"] @ w1b)

    def padw(w, rp, cp):
        out = np.zeros((rp, cp), np.float32)
        out[:w.shape[0], :w.shape[1]] = w
        return out

    def padb(b, cp):
        out = np.zeros((1, cp), np.float32)
        out[:, :b.shape[1]] = b
        return out

    return dict(
        O=O,
        dims=jnp.asarray(master["dims"]),
        offs=jnp.asarray(offs),
        fused1=jnp.asarray(fused1, jnp.bfloat16),
        wcont1=jnp.asarray(wcont1, jnp.bfloat16),
        b1=jnp.asarray(b1_fused),
        w2=jnp.asarray(padw(master["w2"], H1p, H2p), jnp.bfloat16),
        b2=jnp.asarray(padb(master["b2"], H2p)),
        w_out=jnp.asarray(padw(master["w_out"], H2p, Op), jnp.bfloat16),
        b_out=jnp.asarray(padb(master["b_out"], Op)),
    )


# -----------------------------------------------------------------------------
# Pure-JAX reference mirroring the PyTorch module (f32 master weights)
# -----------------------------------------------------------------------------
def reference_forward(master, cat_idx, continuous):
    F = len(master["feats"])
    dims = master["dims"]
    embs = []
    for f in range(F):
        idx = jnp.minimum(cat_idx[:, f], dims[f])            # OOV clamp
        embs.append(jnp.asarray(master["tables"][f])[idx])
    cat_in = jnp.concatenate(embs, axis=1)
    cat_h = cat_in @ jnp.asarray(master["w_cat"]) + jnp.asarray(master["b_cat"])
    cont_h = continuous @ jnp.asarray(master["w_cont"]) + jnp.asarray(master["b_cont"])
    x = jnp.concatenate([cat_h, cont_h], axis=1)
    h = jax.nn.relu(x @ jnp.asarray(master["w1"]) + jnp.asarray(master["b1"]))
    h = jax.nn.relu(h @ jnp.asarray(master["w2"]) + jnp.asarray(master["b2"]))
    return h @ jnp.asarray(master["w_out"]) + jnp.asarray(master["b_out"])


# -----------------------------------------------------------------------------
if __name__ == "__main__":
    B = 48                                  # not a tile multiple -> exercises padding
    categorical_dims = {"a": 5, "b": 7, "c": 11}
    continuous_dims = 4
    embedding_dim = 2
    hidden_sizes = [64, 32]
    output_size = 32

    key = jax.random.PRNGKey(0)
    k_par, k_cat, k_cont = jax.random.split(key, 3)

    master = init_params(k_par, categorical_dims, continuous_dims,
                         hidden_sizes, output_size, embedding_dim)
    kparams = build_kernel_params(master)

    # raw categorical indices, deliberately including out-of-vocab values
    cat_cols = []
    for i, f in enumerate(master["feats"]):
        kf = jax.random.fold_in(k_cat, i)
        cat_cols.append(jax.random.randint(kf, (B,), 0,
                                           categorical_dims[f] + 3, jnp.int32))
    cat_idx = jnp.stack(cat_cols, axis=1)                    # (B, F) int32
    continuous = jax.random.normal(k_cont, (B, continuous_dims), jnp.float32)

    out = embed_mlp_forward(kparams, cat_idx, continuous, tb=32)  # grid = 2 tiles
    out = jax.block_until_ready(out)

    ref = reference_forward(master, cat_idx, continuous)
    # bf16 weights / bf16 MXU operands vs f32 reference -> loosened tolerance
    np.testing.assert_allclose(np.asarray(out), np.asarray(ref),
                               rtol=2e-2, atol=2e-2)
    print("KERNEL_OK")
</pallas_src>

<mosaic_0001>
module attributes {stable_mosaic.version = 11 : i64} {
  func.func @embed_mlp_kernel(%arg0: i32, %arg1: memref<3xi32, #tpu.memory_space<smem>>, %arg2: memref<3xi32, #tpu.memory_space<smem>>, %arg3: memref<32x3xi32, #tpu.memory_space<vmem>>, %arg4: memref<32x4xf32, #tpu.memory_space<vmem>>, %arg5: memref<128x128xbf16, #tpu.memory_space<vmem>>, %arg6: memref<4x128xbf16, #tpu.memory_space<vmem>>, %arg7: memref<1x128xf32, #tpu.memory_space<vmem>>, %arg8: memref<128x128xbf16, #tpu.memory_space<vmem>>, %arg9: memref<1x128xf32, #tpu.memory_space<vmem>>, %arg10: memref<128x128xbf16, #tpu.memory_space<vmem>>, %arg11: memref<1x128xf32, #tpu.memory_space<vmem>>, %arg12: memref<32x128xf32, #tpu.memory_space<vmem>>) attributes {dimension_semantics = [#tpu.dimension_semantics<parallel>], iteration_bounds = array<i64: 2>, scalar_prefetch = 2 : i64, scratch_operands = 0 : i64, tpu.core_type = #tpu.core_type<tc>, window_params = [{transform_indices = @transform_0, window_bounds = array<i64: 32, 3>}, {transform_indices = @transform_1, window_bounds = array<i64: 32, 4>}, {pipeline_mode = #tpu.pipeline_mode<synchronous>, transform_indices = @transform_2, window_bounds = array<i64: 128, 128>}, {pipeline_mode = #tpu.pipeline_mode<synchronous>, transform_indices = @transform_3, window_bounds = array<i64: 4, 128>}, {pipeline_mode = #tpu.pipeline_mode<synchronous>, transform_indices = @transform_4, window_bounds = array<i64: 1, 128>}, {pipeline_mode = #tpu.pipeline_mode<synchronous>, transform_indices = @transform_5, window_bounds = array<i64: 128, 128>}, {pipeline_mode = #tpu.pipeline_mode<synchronous>, transform_indices = @transform_6, window_bounds = array<i64: 1, 128>}, {pipeline_mode = #tpu.pipeline_mode<synchronous>, transform_indices = @transform_7, window_bounds = array<i64: 128, 128>}, {pipeline_mode = #tpu.pipeline_mode<synchronous>, transform_indices = @transform_8, window_bounds = array<i64: 1, 128>}, {transform_indices = @transform_9, window_bounds = array<i64: 32, 128>}]} {
    %0 = tpu.iota {dimensions = array<i32: 1>} : vector<32x128xi32>
    %cst = arith.constant 0.000000e+00 : bf16
    %1 = vector.broadcast %cst : bf16 to vector<32x128xbf16>
    %c0 = arith.constant 0 : index
    %c0_0 = arith.constant 0 : index
    %2 = vector.load %arg3[%c0, %c0_0] : memref<32x3xi32, #tpu.memory_space<vmem>>, vector<32x1xi32>
    %c0_1 = arith.constant 0 : index
    %3 = memref.load %arg1[%c0_1] : memref<3xi32, #tpu.memory_space<smem>>
    %4 = vector.broadcast %3 : i32 to vector<32x1xi32>
    %5 = arith.minsi %2, %4 : vector<32x1xi32>
    %c0_2 = arith.constant 0 : index
    %6 = memref.load %arg2[%c0_2] : memref<3xi32, #tpu.memory_space<smem>>
    %7 = vector.broadcast %6 : i32 to vector<32x1xi32>
    %8 = arith.addi %5, %7 : vector<32x1xi32>
    %9 = vector.broadcast %8 : vector<32x1xi32> to vector<32x128xi32>
    %10 = arith.cmpi eq, %0, %9 : vector<32x128xi32>
    %11 = arith.extui %10 : vector<32x128xi1> to vector<32x128xi32>
    %12 = arith.sitofp %11 : vector<32x128xi32> to vector<32x128xf32>
    %13 = arith.truncf %12 : vector<32x128xf32> to vector<32x128xbf16>
    %14 = arith.addf %1, %13 : vector<32x128xbf16>
    %c0_3 = arith.constant 0 : index
    %c1 = arith.constant 1 : index
    %15 = vector.load %arg3[%c0_3, %c1] : memref<32x3xi32, #tpu.memory_space<vmem>>, vector<32x1xi32>
    %c1_4 = arith.constant 1 : index
    %16 = memref.load %arg1[%c1_4] : memref<3xi32, #tpu.memory_space<smem>>
    %17 = vector.broadcast %16 : i32 to vector<32x1xi32>
    %18 = arith.minsi %15, %17 : vector<32x1xi32>
    %c1_5 = arith.constant 1 : index
    %19 = memref.load %arg2[%c1_5] : memref<3xi32, #tpu.memory_space<smem>>
    %20 = vector.broadcast %19 : i32 to vector<32x1xi32>
    %21 = arith.addi %18, %20 : vector<32x1xi32>
    %22 = vector.broadcast %21 : vector<32x1xi32> to vector<32x128xi32>
    %23 = arith.cmpi eq, %0, %22 : vector<32x128xi32>
    %24 = arith.extui %23 : vector<32x128xi1> to vector<32x128xi32>
    %25 = arith.sitofp %24 : vector<32x128xi32> to vector<32x128xf32>
    %26 = arith.truncf %25 : vector<32x128xf32> to vector<32x128xbf16>
    %27 = arith.addf %14, %26 : vector<32x128xbf16>
    %c0_6 = arith.constant 0 : index
    %c2 = arith.constant 2 : index
    %28 = vector.load %arg3[%c0_6, %c2] : memref<32x3xi32, #tpu.memory_space<vmem>>, vector<32x1xi32>
    %c2_7 = arith.constant 2 : index
    %29 = memref.load %arg1[%c2_7] : memref<3xi32, #tpu.memory_space<smem>>
    %30 = vector.broadcast %29 : i32 to vector<32x1xi32>
    %31 = arith.minsi %28, %30 : vector<32x1xi32>
    %c2_8 = arith.constant 2 : index
    %32 = memref.load %arg2[%c2_8] : memref<3xi32, #tpu.memory_space<smem>>
    %33 = vector.broadcast %32 : i32 to vector<32x1xi32>
    %34 = arith.addi %31, %33 : vector<32x1xi32>
    %35 = vector.broadcast %34 : vector<32x1xi32> to vector<32x128xi32>
    %36 = arith.cmpi eq, %0, %35 : vector<32x128xi32>
    %37 = arith.extui %36 : vector<32x128xi1> to vector<32x128xi32>
    %38 = arith.sitofp %37 : vector<32x128xi32> to vector<32x128xf32>
    %39 = arith.truncf %38 : vector<32x128xf32> to vector<32x128xbf16>
    %40 = arith.addf %27, %39 : vector<32x128xbf16>
    %c0_9 = arith.constant 0 : index
    %c0_10 = arith.constant 0 : index
    %41 = vector.load %arg5[%c0_9, %c0_10] : memref<128x128xbf16, #tpu.memory_space<vmem>>, vector<128x128xbf16>
    %cst_11 = arith.constant dense<0.000000e+00> : vector<32x128xf32>
    %42 = tpu.matmul %40, %41, %cst_11 {dimension_numbers = #tpu.dot_dimension_numbers<[1], [0], [0], [1], [0, 0, 1, 1], [], []>} : vector<32x128xbf16>, vector<128x128xbf16>, vector<32x128xf32> -> vector<32x128xf32>
    %c0_12 = arith.constant 0 : index
    %c0_13 = arith.constant 0 : index
    %43 = vector.load %arg4[%c0_12, %c0_13] : memref<32x4xf32, #tpu.memory_space<vmem>>, vector<32x4xf32>
    %44 = arith.truncf %43 : vector<32x4xf32> to vector<32x4xbf16>
    %c0_14 = arith.constant 0 : index
    %c0_15 = arith.constant 0 : index
    %45 = vector.load %arg6[%c0_14, %c0_15] : memref<4x128xbf16, #tpu.memory_space<vmem>>, vector<4x128xbf16>
    %cst_16 = arith.constant dense<0.000000e+00> : vector<32x128xf32>
    %46 = tpu.matmul %44, %45, %cst_16 {dimension_numbers = #tpu.dot_dimension_numbers<[1], [0], [0], [1], [0, 0, 1, 1], [], []>} : vector<32x4xbf16>, vector<4x128xbf16>, vector<32x128xf32> -> vector<32x128xf32>
    %47 = arith.addf %42, %46 : vector<32x128xf32>
    %c0_17 = arith.constant 0 : index
    %c0_18 = arith.constant 0 : index
    %48 = vector.load %arg7[%c0_17, %c0_18] : memref<1x128xf32, #tpu.memory_space<vmem>>, vector<1x128xf32>
    %49 = vector.broadcast %48 : vector<1x128xf32> to vector<32x128xf32>
    %50 = arith.addf %47, %49 : vector<32x128xf32>
    %cst_19 = arith.constant 0.000000e+00 : f32
    %51 = vector.broadcast %cst_19 : f32 to vector<32x128xf32>
    %52 = arith.maximumf %50, %51 : vector<32x128xf32>
    %53 = arith.truncf %52 : vector<32x128xf32> to vector<32x128xbf16>
    %c0_20 = arith.constant 0 : index
    %c0_21 = arith.constant 0 : index
    %54 = vector.load %arg8[%c0_20, %c0_21] : memref<128x128xbf16, #tpu.memory_space<vmem>>, vector<128x128xbf16>
    %cst_22 = arith.constant dense<0.000000e+00> : vector<32x128xf32>
    %55 = tpu.matmul %53, %54, %cst_22 {dimension_numbers = #tpu.dot_dimension_numbers<[1], [0], [0], [1], [0, 0, 1, 1], [], []>} : vector<32x128xbf16>, vector<128x128xbf16>, vector<32x128xf32> -> vector<32x128xf32>
    %c0_23 = arith.constant 0 : index
    %c0_24 = arith.constant 0 : index
    %56 = vector.load %arg9[%c0_23, %c0_24] : memref<1x128xf32, #tpu.memory_space<vmem>>, vector<1x128xf32>
    %57 = vector.broadcast %56 : vector<1x128xf32> to vector<32x128xf32>
    %58 = arith.addf %55, %57 : vector<32x128xf32>
    %cst_25 = arith.constant 0.000000e+00 : f32
    %59 = vector.broadcast %cst_25 : f32 to vector<32x128xf32>
    %60 = arith.maximumf %58, %59 : vector<32x128xf32>
    %61 = arith.truncf %60 : vector<32x128xf32> to vector<32x128xbf16>
    %c0_26 = arith.constant 0 : index
    %c0_27 = arith.constant 0 : index
    %62 = vector.load %arg10[%c0_26, %c0_27] : memref<128x128xbf16, #tpu.memory_space<vmem>>, vector<128x128xbf16>
    %cst_28 = arith.constant dense<0.000000e+00> : vector<32x128xf32>
    %63 = tpu.matmul %61, %62, %cst_28 {dimension_numbers = #tpu.dot_dimension_numbers<[1], [0], [0], [1], [0, 0, 1, 1], [], []>} : vector<32x128xbf16>, vector<128x128xbf16>, vector<32x128xf32> -> vector<32x128xf32>
    %c0_29 = arith.constant 0 : index
    %c0_30 = arith.constant 0 : index
    %64 = vector.load %arg11[%c0_29, %c0_30] : memref<1x128xf32, #tpu.memory_space<vmem>>, vector<1x128xf32>
    %65 = vector.broadcast %64 : vector<1x128xf32> to vector<32x128xf32>
    %66 = arith.addf %63, %65 : vector<32x128xf32>
    %c0_31 = arith.constant 0 : index
    %c0_32 = arith.constant 0 : index
    %67 = vector.load %arg12[%c0_31, %c0_32] : memref<32x128xf32, #tpu.memory_space<vmem>>, vector<32x128xf32>
    tpu.vector_store %arg12[%c0_31, %c0_32], %66 {strides = array<i32>} : memref<32x128xf32, #tpu.memory_space<vmem>>, vector<32x128xf32>,
    return
  }
  func.func @transform_0(%arg0: i32, %arg1: memref<3xi32, #tpu.memory_space<smem>>, %arg2: memref<3xi32, #tpu.memory_space<smem>>) -> (i32, i32) {
    %c0_i32 = arith.constant 0 : i32
    %c0_i32_0 = arith.constant 0 : i32
    return %arg0, %c0_i32 : i32, i32
  }
  func.func @transform_1(%arg0: i32, %arg1: memref<3xi32, #tpu.memory_space<smem>>, %arg2: memref<3xi32, #tpu.memory_space<smem>>) -> (i32, i32) {
    %c0_i32 = arith.constant 0 : i32
    %c0_i32_0 = arith.constant 0 : i32
    return %arg0, %c0_i32 : i32, i32
  }
  func.func @transform_2(%arg0: i32, %arg1: memref<3xi32, #tpu.memory_space<smem>>, %arg2: memref<3xi32, #tpu.memory_space<smem>>) -> (i32, i32) {
    %c0_i32 = arith.constant 0 : i32
    %c0_i32_0 = arith.constant 0 : i32
    %c0_i32_1 = arith.constant 0 : i32
    return %c0_i32, %c0_i32_0 : i32, i32
  }
  func.func @transform_3(%arg0: i32, %arg1: memref<3xi32, #tpu.memory_space<smem>>, %arg2: memref<3xi32, #tpu.memory_space<smem>>) -> (i32, i32) {
    %c0_i32 = arith.constant 0 : i32
    %c0_i32_0 = arith.constant 0 : i32
    %c0_i32_1 = arith.constant 0 : i32
    return %c0_i32, %c0_i32_0 : i32, i32
  }
  func.func @transform_4(%arg0: i32, %arg1: memref<3xi32, #tpu.memory_space<smem>>, %arg2: memref<3xi32, #tpu.memory_space<smem>>) -> (i32, i32) {
    %c0_i32 = arith.constant 0 : i32
    %c0_i32_0 = arith.constant 0 : i32
    %c0_i32_1 = arith.constant 0 : i32
    return %c0_i32, %c0_i32_0 : i32, i32
  }
  func.func @transform_5(%arg0: i32, %arg1: memref<3xi32, #tpu.memory_space<smem>>, %arg2: memref<3xi32, #tpu.memory_space<smem>>) -> (i32, i32) {
    %c0_i32 = arith.constant 0 : i32
    %c0_i32_0 = arith.constant 0 : i32
    %c0_i32_1 = arith.constant 0 : i32
    return %c0_i32, %c0_i32_0 : i32, i32
  }
  func.func @transform_6(%arg0: i32, %arg1: memref<3xi32, #tpu.memory_space<smem>>, %arg2: memref<3xi32, #tpu.memory_space<smem>>) -> (i32, i32) {
    %c0_i32 = arith.constant 0 : i32
    %c0_i32_0 = arith.constant 0 : i32
    %c0_i32_1 = arith.constant 0 : i32
    return %c0_i32, %c0_i32_0 : i32, i32
  }
  func.func @transform_7(%arg0: i32, %arg1: memref<3xi32, #tpu.memory_space<smem>>, %arg2: memref<3xi32, #tpu.memory_space<smem>>) -> (i32, i32) {
    %c0_i32 = arith.constant 0 : i32
    %c0_i32_0 = arith.constant 0 : i32
    %c0_i32_1 = arith.constant 0 : i32
    return %c0_i32, %c0_i32_0 : i32, i32
  }
  func.func @transform_8(%arg0: i32, %arg1: memref<3xi32, #tpu.memory_space<smem>>, %arg2: memref<3xi32, #tpu.memory_space<smem>>) -> (i32, i32) {
    %c0_i32 = arith.constant 0 : i32
    %c0_i32_0 = arith.constant 0 : i32
    %c0_i32_1 = arith.constant 0 : i32
    return %c0_i32, %c0_i32_0 : i32, i32
  }
  func.func @transform_9(%arg0: i32, %arg1: memref<3xi32, #tpu.memory_space<smem>>, %arg2: memref<3xi32, #tpu.memory_space<smem>>) -> (i32, i32) {
    %c0_i32 = arith.constant 0 : i32
    %c0_i32_0 = arith.constant 0 : i32
    return %arg0, %c0_i32 : i32, i32
  }
}

</mosaic_0001>

<llo_original>
// kernel: tpu_custom_call.1
$region0: #{tpu_custom_call.1}
  #allocation0 [shape = 'u32[]', space=smem, size = 0x4, offset = 0x4, fixed_abs, tag = 'smem constant byte address 0x4 - core index']
  #allocation1 [shape = 'u32[72,128]{1,0:T(1,128)}', space=vmem, size = 0x9000, scoped, tag = 'internal scratch']
  #allocation2 [shape = 's32[1]{0}', space=sflag, size = 0x4, scoped, tag = 'scoped memory for tpu_custom_call.1']
  #allocation3 [shape = 'u8[512]{0}', space=smem, size = 0x200, scoped, tag = 'prefetched SMEM operand 0']
  #allocation4 [shape = 'u8[512]{0}', space=smem, size = 0x200, scoped, tag = 'prefetched SMEM operand 1']
  %s0 = inlined_call_operand.vmem [shape: s32[3], index: 0, kind: input, shape index: {}]
  %s1 = inlined_call_operand.vmem [shape: s32[3], index: 1, kind: input, shape index: {}]
  %s2 = inlined_call_operand.vmem [shape: s32[64,3], index: 2, kind: input, shape index: {}]
  %s3 = inlined_call_operand.vmem [shape: f32[64,4], index: 3, kind: input, shape index: {}]
  %s4 = inlined_call_operand.vmem [shape: bf16[128,128], index: 4, kind: input, shape index: {}]
  %s5 = inlined_call_operand.vmem [shape: bf16[4,128], index: 5, kind: input, shape index: {}]
  %s6 = inlined_call_operand.vmem [shape: f32[1,128], index: 6, kind: input, shape index: {}]
  %s7 = inlined_call_operand.vmem [shape: bf16[128,128], index: 7, kind: input, shape index: {}]
  %s8 = inlined_call_operand.vmem [shape: f32[1,128], index: 8, kind: input, shape index: {}]
  %s9 = inlined_call_operand.hbm [shape: bf16[128,128], index: 9, kind: input, shape index: {}]
  %s10 = inlined_call_operand.vmem [shape: f32[1,128], index: 10, kind: input, shape index: {}]
  %s11 = inlined_call_operand.hbm [shape: f32[64,128], index: 11, kind: output, shape index: {}]
  %s12 = sld [smem:[#allocation0]]
  $region73: #{tpu_custom_call.1} parent=0
    _
  %s14 = ssub.s32 1, %s12
  %s15 = scalar_select 0, %s14, %s12
  %s17 = sshll.u32 %s0, 4
  %s18 = int_to_ptr.vmem [resolvable:$true] %s17
  %20 = dma.vmem_to_smem %s18, 16, [#allocation3], [#allocation2]
  %s22 = sshll.u32 %s1, 4
  %s23 = int_to_ptr.vmem [resolvable:$true] %s22
  %25 = dma.vmem_to_smem %s23, 16, [#allocation4], [#allocation2]
  %27 = dma.done [#allocation2], 32
  %28 = sfence
  $region1: #{tpu_custom_call.1} parent=0
    #allocation5 [shape = 'u8[32768]{0}', space=vmem, size = 0x8000, scoped, tag = 'input window, operand 9, single buffered']
    #allocation6 [shape = 's32[2]{0}', space=sflag, size = 0x8, scoped, tag = 'scoped memory for tpu_custom_call.1']
    #allocation7 [shape = 's32[2]{0}', space=sflag, size = 0x8, scoped, tag = 'scoped memory for tpu_custom_call.1']
    #allocation8 [shape = 'u8[32768]{0}', space=vmem, size = 0x8000, scoped, tag = 'output window, operand 0']
    %29 = vsyncpa [#allocation6], 0
    %30 = vsyncpa [#allocation7], 0
    %s31 = scalar_lea.sflag [#allocation7], 1
    %32 = vsyncpa %s31, 0
    loop: start=0, step=1, limit=4
    $region2: #{tpu_custom_call.1} parent=1 // loop_pre_header
      _
    $region3: #{tpu_custom_call.1} parent=1 // loop_header
      %s34 = sphi 0, %s38
      %p35 = scmp.ge.s32.totalorder %s34, 4
      %s44 = sphi 0, %s46
      %s47 = sphi 0, %s44
      %s48 = sphi 0, %s47
      %s64 = sphi 0, %s48
      %s70 = sphi 0, %s72
      %s73 = sphi 0, %s70
      %s74 = sphi 0, %s73
      %s90 = sphi 0, %s74
      %s94 = sphi 0, %s94
      %s96 = sphi 0, %s94
      %s97 = sphi 0, %s96
      %s111 = sphi 0, %s97
      %s115 = sphi 0, %s115
      %s117 = sphi 0, %s115
      %s118 = sphi 0, %s117
      %s132 = sphi 0, %s118
      %s136 = sphi 0, %s136
      %s138 = sphi 0, %s136
      %s139 = sphi 0, %s138
      %s153 = sphi 0, %s139
      %s157 = sphi 0, %s157
      %s159 = sphi 0, %s157
      %s160 = sphi 0, %s159
      %s174 = sphi 0, %s160
      %s178 = sphi 0, %s178
      %s180 = sphi 0, %s178
      %s181 = sphi 0, %s180
      %s195 = sphi 0, %s181
      %s199 = sphi 0, %s199
      %s201 = sphi 0, %s199
      %s202 = sphi 0, %s201
      %s216 = sphi 0, %s202
      %s220 = sphi 0, %s220
      %s222 = sphi 0, %s220
      %s223 = sphi 0, %s222
      %s237 = sphi 0, %s223
      %s243 = sphi 0, %s245
      %s246 = sphi 0, %s243
      %s247 = sphi 0, %s246
      %s263 = sphi 0, %s247
    $region4: #{tpu_custom_call.1} parent=1 // loop_header_branch
      %37 = sbr.rel (%p35) target = $region8
    $region5: #{tpu_custom_call.1} parent=1 // loop_body
      %s39 = ssub.s32 %s34, 1
      %s40 = ssub.s32 %s34, 2
      %s41 = sadd.s32 %s34, 1
      %s42 = ssub.s32 %s34, %s41
      %p43 = scmp.eq.s32.totalorder %s42, 0
      %s45 = sadd.s32 %s44, 1
      %s46 = scalar_select %p43, %s44, %s45
      %p49 = pneg %p43
      %p50 = scmp.eq.s32.totalorder %s34, 1
      %p51 = por %p49, %p50
      %p52 = scmp.ne.s32.totalorder %s44, %s47
      %p53 = scmp.eq.s32.totalorder %s34, 0
      %p54 = por %p52, %p53
      %p55 = scmp.ne.s32.totalorder %s44, %s47
      %p56 = scmp.eq.s32.totalorder %s39, 1
      %p57 = por %p55, %p56
      %p58 = scmp.ne.s32.totalorder %s47, %s48
      %p59 = scmp.eq.s32.totalorder %s39, 0
      %p60 = por %p58, %p59
      %p61 = scmp.ne.s32.totalorder %s47, %s48
      %p62 = scmp.eq.s32.totalorder %s40, 1
      %p63 = por %p61, %p62
      %p65 = scmp.ne.s32.totalorder %s48, %s64
      %p66 = scmp.eq.s32.totalorder %s40, 0
      %p67 = por %p65, %p66
      %s68 = ssub.s32 %s34, %s41
      %p69 = scmp.eq.s32.totalorder %s68, 0
      %s71 = sadd.s32 %s70, 1
      %s72 = scalar_select %p69, %s70, %s71
      %p75 = pneg %p69
      %p76 = scmp.eq.s32.totalorder %s34, 1
      %p77 = por %p75, %p76
      %p78 = scmp.ne.s32.totalorder %s70, %s73
      %p79 = scmp.eq.s32.totalorder %s34, 0
      %p80 = por %p78, %p79
      %p81 = scmp.ne.s32.totalorder %s70, %s73
      %p82 = scmp.eq.s32.totalorder %s39, 1
      %p83 = por %p81, %p82
      %p84 = scmp.ne.s32.totalorder %s73, %s74
      %p85 = scmp.eq.s32.totalorder %s39, 0
      %p86 = por %p84, %p85
      %p87 = scmp.ne.s32.totalorder %s73, %s74
      %p88 = scmp.eq.s32.totalorder %s40, 1
      %p89 = por %p87, %p88
      %p91 = scmp.ne.s32.totalorder %s74, %s90
      %p92 = scmp.eq.s32.totalorder %s40, 0
      %p93 = por %p91, %p92
      %s95 = sadd.s32 %s94, 1
      %p98 = scmp.eq.s32.totalorder %s34, 1
      %p99 = scmp.ne.s32.totalorder %s94, %s96
      %p100 = scmp.eq.s32.totalorder %s34, 0
      %p101 = por %p99, %p100
      %p102 = scmp.ne.s32.totalorder %s94, %s96
      %p103 = scmp.eq.s32.totalorder %s39, 1
      %p104 = por %p102, %p103
      %p105 = scmp.ne.s32.totalorder %s96, %s97
      %p106 = scmp.eq.s32.totalorder %s39, 0
      %p107 = por %p105, %p106
      %p108 = scmp.ne.s32.totalorder %s96, %s97
      %p109 = scmp.eq.s32.totalorder %s40, 1
      %p110 = por %p108, %p109
      %p112 = scmp.ne.s32.totalorder %s97, %s111
      %p113 = scmp.eq.s32.totalorder %s40, 0
      %p114 = por %p112, %p113
      %s116 = sadd.s32 %s115, 1
      %p119 = scmp.eq.s32.totalorder %s34, 1
      %p120 = scmp.ne.s32.totalorder %s115, %s117
      %p121 = scmp.eq.s32.totalorder %s34, 0
      %p122 = por %p120, %p121
      %p123 = scmp.ne.s32.totalorder %s115, %s117
      %p124 = scmp.eq.s32.totalorder %s39, 1
      %p125 = por %p123, %p124
      %p126 = scmp.ne.s32.totalorder %s117, %s118
      %p127 = scmp.eq.s32.totalorder %s39, 0
      %p128 = por %p126, %p127
      %p129 = scmp.ne.s32.totalorder %s117, %s118
      %p130 = scmp.eq.s32.totalorder %s40, 1
      %p131 = por %p129, %p130
      %p133 = scmp.ne.s32.totalorder %s118, %s132
      %p134 = scmp.eq.s32.totalorder %s40, 0
      %p135 = por %p133, %p134
      %s137 = sadd.s32 %s136, 1
      %p140 = scmp.eq.s32.totalorder %s34, 1
      %p141 = scmp.ne.s32.totalorder %s136, %s138
      %p142 = scmp.eq.s32.totalorder %s34, 0
      %p143 = por %p141, %p142
      %p144 = scmp.ne.s32.totalorder %s136, %s138
      %p145 = scmp.eq.s32.totalorder %s39, 1
      %p146 = por %p144, %p145
      %p147 = scmp.ne.s32.totalorder %s138, %s139
      %p148 = scmp.eq.s32.totalorder %s39, 0
      %p149 = por %p147, %p148
      %p150 = scmp.ne.s32.totalorder %s138, %s139
      %p151 = scmp.eq.s32.totalorder %s40, 1
      %p152 = por %p150, %p151
      %p154 = scmp.ne.s32.totalorder %s139, %s153
      %p155 = scmp.eq.s32.totalorder %s40, 0
      %p156 = por %p154, %p155
      %s158 = sadd.s32 %s157, 1
      %p161 = scmp.eq.s32.totalorder %s34, 1
      %p162 = scmp.ne.s32.totalorder %s157, %s159
      %p163 = scmp.eq.s32.totalorder %s34, 0
      %p164 = por %p162, %p163
      %p165 = scmp.ne.s32.totalorder %s157, %s159
      %p166 = scmp.eq.s32.totalorder %s39, 1
      %p167 = por %p165, %p166
      %p168 = scmp.ne.s32.totalorder %s159, %s160
      %p169 = scmp.eq.s32.totalorder %s39, 0
      %p170 = por %p168, %p169
      %p171 = scmp.ne.s32.totalorder %s159, %s160
      %p172 = scmp.eq.s32.totalorder %s40, 1
      %p173 = por %p171, %p172
      %p175 = scmp.ne.s32.totalorder %s160, %s174
      %p176 = scmp.eq.s32.totalorder %s40, 0
      %p177 = por %p175, %p176
      %s179 = sadd.s32 %s178, 1
      %p182 = scmp.eq.s32.totalorder %s34, 1
      %p183 = scmp.ne.s32.totalorder %s178, %s180
      %p184 = scmp.eq.s32.totalorder %s34, 0
      %p185 = por %p183, %p184
      %p186 = scmp.ne.s32.totalorder %s178, %s180
      %p187 = scmp.eq.s32.totalorder %s39, 1
      %p188 = por %p186, %p187
      %p189 = scmp.ne.s32.totalorder %s180, %s181
      %p190 = scmp.eq.s32.totalorder %s39, 0
      %p191 = por %p189, %p190
      %p192 = scmp.ne.s32.totalorder %s180, %s181
      %p193 = scmp.eq.s32.totalorder %s40, 1
      %p194 = por %p192, %p193
      %p196 = scmp.ne.s32.totalorder %s181, %s195
      %p197 = scmp.eq.s32.totalorder %s40, 0
      %p198 = por %p196, %p197
      %s200 = sadd.s32 %s199, 1
      %p203 = scmp.eq.s32.totalorder %s34, 1
      %p204 = scmp.ne.s32.totalorder %s199, %s201
      %p205 = scmp.eq.s32.totalorder %s34, 0
      %p206 = por %p204, %p205
      %p207 = scmp.ne.s32.totalorder %s199, %s201
      %p208 = scmp.eq.s32.totalorder %s39, 1
      %p209 = por %p207, %p208
      %p210 = scmp.ne.s32.totalorder %s201, %s202
      %p211 = scmp.eq.s32.totalorder %s39, 0
      %p212 = por %p210, %p211
      %p213 = scmp.ne.s32.totalorder %s201, %s202
      %p214 = scmp.eq.s32.totalorder %s40, 1
      %p215 = por %p213, %p214
      %p217 = scmp.ne.s32.totalorder %s202, %s216
      %p218 = scmp.eq.s32.totalorder %s40, 0
      %p219 = por %p217, %p218
      %s221 = sadd.s32 %s220, 1
      %p224 = scmp.eq.s32.totalorder %s34, 1
      %p225 = scmp.ne.s32.totalorder %s220, %s222
      %p226 = scmp.eq.s32.totalorder %s34, 0
      %p227 = por %p225, %p226
      %p228 = scmp.ne.s32.totalorder %s220, %s222
      %p229 = scmp.eq.s32.totalorder %s39, 1
      %p230 = por %p228, %p229
      %p231 = scmp.ne.s32.totalorder %s222, %s223
      %p232 = scmp.eq.s32.totalorder %s39, 0
      %p233 = por %p231, %p232
      %p234 = scmp.ne.s32.totalorder %s222, %s223
      %p235 = scmp.eq.s32.totalorder %s40, 1
      %p236 = por %p234, %p235
      %p238 = scmp.ne.s32.totalorder %s223, %s237
      %p239 = scmp.eq.s32.totalorder %s40, 0
      %p240 = por %p238, %p239
      %s241 = ssub.s32 %s34, %s41
      %p242 = scmp.eq.s32.totalorder %s241, 0
      %s244 = sadd.s32 %s243, 1
      %s245 = scalar_select %p242, %s243, %s244
      %p248 = pneg %p242
      %p249 = scmp.eq.s32.totalorder %s34, 1
      %p250 = por %p248, %p249
      %p251 = scmp.ne.s32.totalorder %s243, %s246
      %p252 = scmp.eq.s32.totalorder %s34, 0
      %p253 = por %p251, %p252
      %p254 = scmp.ne.s32.totalorder %s243, %s246
      %p255 = scmp.eq.s32.totalorder %s39, 1
      %p256 = por %p254, %p255
      %p257 = scmp.ne.s32.totalorder %s246, %s247
      %p258 = scmp.eq.s32.totalorder %s39, 0
      %p259 = por %p257, %p258
      %p260 = scmp.ne.s32.totalorder %s246, %s247
      %p261 = scmp.eq.s32.totalorder %s40, 1
      %p262 = por %p260, %p261
      %p264 = scmp.ne.s32.totalorder %s247, %s263
      %p265 = scmp.eq.s32.totalorder %s40, 0
      %p266 = por %p264, %p265
      %p267 = scmp.le.s32.totalorder 1, %s34
      %p268 = scmp.lt.s32.totalorder %s34, 3
      %p269 = pnand %p267, %p268
      %p270 = pneg %p269
      // Predicated region
      $region9: #{tpu_custom_call.1} parent=5 // pred_check
        _
      $region10: #{tpu_custom_call.1} parent=5 // pred_check_branch
        %272 = sbr.rel (%p269) target = $region12
      $region11: #{tpu_custom_call.1} parent=5 // pred_region
        %s273 = ssub.s32 %s34, 1
        // Predicated region
        $region13: #{tpu_custom_call.1} parent=11 // pred_check
          %p274 = pneg %p107
        $region14: #{tpu_custom_call.1} parent=11 // pred_check_branch
          %276 = sbr.rel (%p274) target = $region16
        $region15: #{tpu_custom_call.1} parent=11 // pred_region
          _
        $region16: #{tpu_custom_call.1} parent=11 // pred_fallthru
          _
        // Predicated region
        $region17: #{tpu_custom_call.1} parent=11 // pred_check
          %p277 = pneg %p128
        $region18: #{tpu_custom_call.1} parent=11 // pred_check_branch
          %279 = sbr.rel (%p277) target = $region20
        $region19: #{tpu_custom_call.1} parent=11 // pred_region
          _
        $region20: #{tpu_custom_call.1} parent=11 // pred_fallthru
          _
        // Predicated region
        $region21: #{tpu_custom_call.1} parent=11 // pred_check
          %p280 = pneg %p149
        $region22: #{tpu_custom_call.1} parent=11 // pred_check_branch
          %282 = sbr.rel (%p280) target = $region24
        $region23: #{tpu_custom_call.1} parent=11 // pred_region
          _
        $region24: #{tpu_custom_call.1} parent=11 // pred_fallthru
          _
        // Predicated region
        $region25: #{tpu_custom_call.1} parent=11 // pred_check
          %p283 = pneg %p170
        $region26: #{tpu_custom_call.1} parent=11 // pred_check_branch
          %285 = sbr.rel (%p283) target = $region28
        $region27: #{tpu_custom_call.1} parent=11 // pred_region
          _
        $region28: #{tpu_custom_call.1} parent=11 // pred_fallthru
          _
        // Predicated region
        $region29: #{tpu_custom_call.1} parent=11 // pred_check
          %p286 = pneg %p191
        $region30: #{tpu_custom_call.1} parent=11 // pred_check_branch
          %288 = sbr.rel (%p286) target = $region32
        $region31: #{tpu_custom_call.1} parent=11 // pred_region
          _
        $region32: #{tpu_custom_call.1} parent=11 // pred_fallthru
          _
        // Predicated region
        $region33: #{tpu_custom_call.1} parent=11 // pred_check
          %p289 = pneg %p212
        $region34: #{tpu_custom_call.1} parent=11 // pred_check_branch
          %291 = sbr.rel (%p289) target = $region36
        $region35: #{tpu_custom_call.1} parent=11 // pred_region
          %293 = vsyncadd [#allocation6], 0
          %s294 = sshll.u32 %s9, 4
          %s295 = int_to_ptr.hbm [resolvable:$true] %s294
          %s296 = sshll.u32 [#allocation5], 4
          %s297 = int_to_ptr.vmem [resolvable:$true] %s296
          %302 = dma.hbm_to_vmem [thread:$0]  %s295, 1024, %s297, [#allocation6], 64, 64, 4
        $region36: #{tpu_custom_call.1} parent=11 // pred_fallthru
          _
        // Predicated region
        $region37: #{tpu_custom_call.1} parent=11 // pred_check
          %p303 = pneg %p233
        $region38: #{tpu_custom_call.1} parent=11 // pred_check_branch
          %305 = sbr.rel (%p303) target = $region40
        $region39: #{tpu_custom_call.1} parent=11 // pred_region
          _
        $region40: #{tpu_custom_call.1} parent=11 // pred_fallthru
          _
      $region12: #{tpu_custom_call.1} parent=5 // pred_fallthru
        _
      %p306 = scmp.lt.s32.totalorder %s34, 2
      // Predicated region
      $region41: #{tpu_custom_call.1} parent=5 // pred_check
        %p307 = pneg %p306
      $region42: #{tpu_custom_call.1} parent=5 // pred_check_branch
        %309 = sbr.rel (%p307) target = $region44
      $region43: #{tpu_custom_call.1} parent=5 // pred_region
        // Predicated region
        $region45: #{tpu_custom_call.1} parent=43 // pred_check
          %p310 = pneg %p54
        $region46: #{tpu_custom_call.1} parent=43 // pred_check_branch
          %312 = sbr.rel (%p310) target = $region48
        $region47: #{tpu_custom_call.1} parent=43 // pred_region
          %s313 = smul.u32 4, %s34
          %p314 = scmp.lt.s32.totalorder %s313, 7
          %s315 = scalar_select %p314, %s313, 7
          %s316 = smul.addr %s315, 8
          %s317 = scalar_lea.vmem %s2, %s316
          %s318 = smul.u32 4, %s34
        $region48: #{tpu_custom_call.1} parent=43 // pred_fallthru
          _
        // Predicated region
        $region49: #{tpu_custom_call.1} parent=43 // pred_check
          %p319 = pneg %p80
        $region50: #{tpu_custom_call.1} parent=43 // pred_check_branch
          %321 = sbr.rel (%p319) target = $region52
        $region51: #{tpu_custom_call.1} parent=43 // pred_region
          %s322 = smul.u32 4, %s34
          %p323 = scmp.lt.s32.totalorder %s322, 7
          %s324 = scalar_select %p323, %s322, 7
          %s325 = smul.addr %s324, 8
          %s326 = scalar_lea.vmem %s3, %s325
          %s327 = smul.u32 4, %s34
        $region52: #{tpu_custom_call.1} parent=43 // pred_fallthru
          _
      $region44: #{tpu_custom_call.1} parent=5 // pred_fallthru
        _
      %p328 = scmp.le.s32.totalorder 1, %s34
      %p329 = scmp.lt.s32.totalorder %s34, 3
      %p330 = pnand %p328, %p329
      %p331 = pneg %p330
      // Predicated region
      $region53: #{tpu_custom_call.1} parent=5 // pred_check
        _
      $region54: #{tpu_custom_call.1} parent=5 // pred_check_branch
        %333 = sbr.rel (%p330) target = $region56
      $region55: #{tpu_custom_call.1} parent=5 // pred_region
        %s334 = ssub.s32 %s34, 1
        // Predicated region
        $region57: #{tpu_custom_call.1} parent=55 // pred_check
          %p335 = pneg %p212
        $region58: #{tpu_custom_call.1} parent=55 // pred_check_branch
          %337 = sbr.rel (%p335) target = $region60
        $region59: #{tpu_custom_call.1} parent=55 // pred_region
          %339 = dma.done [#allocation6], 1024
        $region60: #{tpu_custom_call.1} parent=55 // pred_fallthru
          _
        %s340 = smul.u32 4, %s39
        %p341 = scmp.lt.s32.totalorder %s340, 7
        %s342 = scalar_select %p341, %s340, 7
        %s343 = smul.addr %s342, 8
        %s344 = scalar_lea.vmem %s2, %s343
        %p345 = pneg %p60
        %p346 = pneg %p57
        %s347 = smul.u32 4, %s39
        %p348 = scmp.lt.s32.totalorder %s347, 7
        %s349 = scalar_select %p348, %s347, 7
        %s350 = smul.addr %s349, 8
        %s351 = scalar_lea.vmem %s3, %s350
        %p352 = pneg %p86
        %p353 = pneg %p83
        %p354 = pneg %p107
        %p355 = pneg %p104
        %p356 = pneg %p128
        %p357 = pneg %p125
        %p358 = pneg %p149
        %p359 = pneg %p146
        %p360 = pneg %p170
        %p361 = pneg %p167
        %p362 = pneg %p191
        %p363 = pneg %p188
        %p364 = pneg %p212
        %p365 = pneg %p209
        %p366 = pneg %p233
        %p367 = pneg %p230
        %p368 = pneg %p259
        %p369 = pneg %p256
        %s370 = sand.u32 %s246, 1
        %s371 = scalar_lea.sflag [#allocation7], %s370
        %s372 = sand.u32 %s246, 1
        %s373 = smul.addr %s372, 32
        %s374 = scalar_lea.vmem [#allocation8], %s373
        %s375 = smul.u32 4, %s39
        %p376 = scmp.lt.s32.totalorder %s375, 7
        %s377 = scalar_select %p376, %s375, 7
        %s378 = smul.addr %s377, 8
        %s379 = scalar_lea.vmem %s2, %s378
        %s380 = smul.u32 4, %s39
        %s381 = smul.u32 4, %s39
        %p382 = scmp.lt.s32.totalorder %s381, 7
        %s383 = scalar_select %p382, %s381, 7
        %s384 = smul.addr %s383, 8
        %s385 = scalar_lea.vmem %s3, %s384
        %s386 = smul.u32 4, %s39
        %s387 = smul.u32 4, %s39
        %v389 = vlaneseq
        %v390 = vand.u32 %v389, 127
        %v391 = vld [vmem:[%s379] sm:$0xff]
        %v392 = vld [vmem:[%s379 + $0x8] sm:$0xff]
        %v393 = vld [vmem:[%s379 + $0x10] sm:$0xff]
        %v394 = vld [vmem:[%s379 + $0x18] sm:$0xff]
        %s395 = sld [smem:[#allocation3]]
        %v396 = vstv %s395
        %vm397 = vcmp.lt.s32.totalorder %v391, %v396
        %v398 = vsel %vm397, %v391, %v396
        %vm399 = vcmp.lt.s32.totalorder %v392, %v396
        %v400 = vsel %vm399, %v392, %v396
        %vm401 = vcmp.lt.s32.totalorder %v393, %v396
        %v402 = vsel %vm401, %v393, %v396
        %vm403 = vcmp.lt.s32.totalorder %v394, %v396
        %v404 = vsel %vm403, %v394, %v396
        %s405 = sld [smem:[#allocation4]]
        %v406 = vstv %s405
        %v407 = vadd.s32 %v398, %v406
        %v408 = vadd.s32 %v400, %v406
        %v409 = vadd.s32 %v402, %v406
        %v410 = vadd.s32 %v404, %v406
        %411 = vset.pattern.permute.xlu0 0
        %412 = vperm.xlu0 %411, %v407
        %v413 = vpop.permute.xlu0 %412
        %414 = vset.pattern.permute.xlu0 0
        %415 = vperm.xlu0 %414, %v408
        %v416 = vpop.permute.xlu0 %415
        %417 = vset.pattern.permute.xlu0 0
        %418 = vperm.xlu0 %417, %v409
        %v419 = vpop.permute.xlu0 %418
        %420 = vset.pattern.permute.xlu0 0
        %421 = vperm.xlu0 %420, %v410
        %v422 = vpop.permute.xlu0 %421
        %vm423 = vcmp.eq.s32.totalorder %v390, %v413
        %vm424 = vcmp.eq.s32.totalorder %v390, %v416
        %vm425 = vcmp.eq.s32.totalorder %v390, %v419
        %vm426 = vcmp.eq.s32.totalorder %v390, %v422
        %v427 = vsel %vm423, 1, 0
        %v428 = vsel %vm424, 1, 0
        %v429 = vsel %vm425, 1, 0
        %v430 = vsel %vm426, 1, 0
        %v431 = vcvt.s32.f32 %v427
        %v432 = vcvt.s32.f32 %v428
        %v433 = vcvt.s32.f32 %v429
        %v434 = vcvt.s32.f32 %v430
        %v435 = vpack.c.bf16 %v431, %v431
        %v436 = vpack.c.bf16 %v432, %v432
        %v437 = vpack.c.bf16 %v433, %v433
        %v438 = vpack.c.bf16 %v434, %v434
        %v439 = vunpack.c.l.bf16 %v435
        %v440 = vunpack.c.l.bf16 %v436
        %v441 = vunpack.c.l.bf16 %v437
        %v442 = vunpack.c.l.bf16 %v438
        %v443 = vadd.f32 %v439, 0.0
        %v444 = vadd.f32 %v440, 0.0
        %v445 = vadd.f32 %v441, 0.0
        %v446 = vadd.f32 %v442, 0.0
        %v447 = vpack.c.bf16 %v443, %v443
        %v448 = vpack.c.bf16 %v444, %v444
        %v449 = vpack.c.bf16 %v445, %v445
        %v450 = vpack.c.bf16 %v446, %v446
        %s451 = sld [smem:[#allocation3 + $0x1]]
        %v452 = vstv %s451
        %vm453 = vcmp.lt.s32.totalorder %v391, %v452
        %v454 = vsel %vm453, %v391, %v452
        %vm455 = vcmp.lt.s32.totalorder %v392, %v452
        %v456 = vsel %vm455, %v392, %v452
        %vm457 = vcmp.lt.s32.totalorder %v393, %v452
        %v458 = vsel %vm457, %v393, %v452
        %vm459 = vcmp.lt.s32.totalorder %v394, %v452
        %v460 = vsel %vm459, %v394, %v452
        %s461 = sld [smem:[#allocation4 + $0x1]]
        %v462 = vstv %s461
        %v463 = vadd.s32 %v454, %v462
        %v464 = vadd.s32 %v456, %v462
        %v465 = vadd.s32 %v458, %v462
        %v466 = vadd.s32 %v460, %v462
        %467 = vset.pattern.permute.xlu0 1
        %468 = vperm.xlu0 %467, %v463
        %v469 = vpop.permute.xlu0 %468
        %470 = vset.pattern.permute.xlu0 1
        %471 = vperm.xlu0 %470, %v464
        %v472 = vpop.permute.xlu0 %471
        %473 = vset.pattern.permute.xlu0 1
        %474 = vperm.xlu0 %473, %v465
        %v475 = vpop.permute.xlu0 %474
        %476 = vset.pattern.permute.xlu0 1
        %477 = vperm.xlu0 %476, %v466
        %v478 = vpop.permute.xlu0 %477
        %vm479 = vcmp.eq.s32.totalorder %v390, %v469
        %vm480 = vcmp.eq.s32.totalorder %v390, %v472
        %vm481 = vcmp.eq.s32.totalorder %v390, %v475
        %vm482 = vcmp.eq.s32.totalorder %v390, %v478
        %v483 = vsel %vm479, 1, 0
        %v484 = vsel %vm480, 1, 0
        %v485 = vsel %vm481, 1, 0
        %v486 = vsel %vm482, 1, 0
        %v487 = vcvt.s32.f32 %v483
        %v488 = vcvt.s32.f32 %v484
        %v489 = vcvt.s32.f32 %v485
        %v490 = vcvt.s32.f32 %v486
        %v491 = vpack.c.bf16 %v487, %v487
        %v492 = vpack.c.bf16 %v488, %v488
        %v493 = vpack.c.bf16 %v489, %v489
        %v494 = vpack.c.bf16 %v490, %v490
        %v495 = vunpack.c.l.bf16 %v447
        %v496 = vunpack.c.l.bf16 %v448
        %v497 = vunpack.c.l.bf16 %v449
        %v498 = vunpack.c.l.bf16 %v450
        %v499 = vunpack.c.l.bf16 %v491
        %v500 = vunpack.c.l.bf16 %v492
        %v501 = vunpack.c.l.bf16 %v493
        %v502 = vunpack.c.l.bf16 %v494
        %v503 = vadd.f32 %v495, %v499
        %v504 = vadd.f32 %v496, %v500
        %v505 = vadd.f32 %v497, %v501
        %v506 = vadd.f32 %v498, %v502
        %v507 = vpack.c.bf16 %v503, %v503
        %v508 = vpack.c.bf16 %v504, %v504
        %v509 = vpack.c.bf16 %v505, %v505
        %v510 = vpack.c.bf16 %v506, %v506
        %s511 = sld [smem:[#allocation3 + $0x2]]
        %v512 = vstv %s511
        %vm513 = vcmp.lt.s32.totalorder %v391, %v512
        %v514 = vsel %vm513, %v391, %v512
        %vm515 = vcmp.lt.s32.totalorder %v392, %v512
        %v516 = vsel %vm515, %v392, %v512
        %vm517 = vcmp.lt.s32.totalorder %v393, %v512
        %v518 = vsel %vm517, %v393, %v512
        %vm519 = vcmp.lt.s32.totalorder %v394, %v512
        %v520 = vsel %vm519, %v394, %v512
        %s521 = sld [smem:[#allocation4 + $0x2]]
        %v522 = vstv %s521
        %v523 = vadd.s32 %v514, %v522
        %v524 = vadd.s32 %v516, %v522
        %v525 = vadd.s32 %v518, %v522
        %v526 = vadd.s32 %v520, %v522
        %527 = vset.pattern.permute.xlu0 2
        %528 = vperm.xlu0 %527, %v523
        %v529 = vpop.permute.xlu0 %528
        %530 = vset.pattern.permute.xlu0 2
        %531 = vperm.xlu0 %530, %v524
        %v532 = vpop.permute.xlu0 %531
        %533 = vset.pattern.permute.xlu0 2
        %534 = vperm.xlu0 %533, %v525
        %v535 = vpop.permute.xlu0 %534
        %536 = vset.pattern.permute.xlu0 2
        %537 = vperm.xlu0 %536, %v526
        %v538 = vpop.permute.xlu0 %537
        %vm539 = vcmp.eq.s32.totalorder %v390, %v529
        %vm540 = vcmp.eq.s32.totalorder %v390, %v532
        %vm541 = vcmp.eq.s32.totalorder %v390, %v535
        %vm542 = vcmp.eq.s32.totalorder %v390, %v538
        %v543 = vsel %vm539, 1, 0
        %v544 = vsel %vm540, 1, 0
        %v545 = vsel %vm541, 1, 0
        %v546 = vsel %vm542, 1, 0
        %v547 = vcvt.s32.f32 %v543
        %v548 = vcvt.s32.f32 %v544
        %v549 = vcvt.s32.f32 %v545
        %v550 = vcvt.s32.f32 %v546
        %v551 = vpack.c.bf16 %v547, %v547
        %v552 = vpack.c.bf16 %v548, %v548
        %v553 = vpack.c.bf16 %v549, %v549
        %v554 = vpack.c.bf16 %v550, %v550
        %v555 = vunpack.c.l.bf16 %v507
        %v556 = vunpack.c.l.bf16 %v508
        %v557 = vunpack.c.l.bf16 %v509
        %v558 = vunpack.c.l.bf16 %v510
        %v559 = vunpack.c.l.bf16 %v551
        %v560 = vunpack.c.l.bf16 %v552
        %v561 = vunpack.c.l.bf16 %v553
        %v562 = vunpack.c.l.bf16 %v554
        %v563 = vadd.f32 %v555, %v559
        %v564 = vadd.f32 %v556, %v560
        %v565 = vadd.f32 %v557, %v561
        %v566 = vadd.f32 %v558, %v562
        %v567 = vpack.c.bf16 %v564, %v563
        %v568 = vpack.c.bf16 %v566, %v565
        %v569 = vld [vmem:[%s4] sm:$0xf]
        %v570 = vld [vmem:[%s4 + $0x4] sm:$0xf]
        %v571 = vld [vmem:[%s4 + $0x8] sm:$0xf]
        %v572 = vld [vmem:[%s4 + $0xc] sm:$0xf]
        %v573 = vld [vmem:[%s4 + $0x10] sm:$0xf]
        %v574 = vld [vmem:[%s4 + $0x14] sm:$0xf]
        %v575 = vld [vmem:[%s4 + $0x18] sm:$0xf]
        %v576 = vld [vmem:[%s4 + $0x1c] sm:$0xf]
        %v577 = vld [vmem:[%s4 + $0x20] sm:$0xf]
        %v578 = vld [vmem:[%s4 + $0x24] sm:$0xf]
        %v579 = vld [vmem:[%s4 + $0x28] sm:$0xf]
        %v580 = vld [vmem:[%s4 + $0x2c] sm:$0xf]
        %v581 = vld [vmem:[%s4 + $0x30] sm:$0xf]
        %v582 = vld [vmem:[%s4 + $0x34] sm:$0xf]
        %v583 = vld [vmem:[%s4 + $0x38] sm:$0xf]
        %v584 = vld [vmem:[%s4 + $0x3c] sm:$0xf]
        %v585 = vld [vmem:[%s385] sm:$0xff]
        %v586 = vld [vmem:[%s385 + $0x8] sm:$0xff]
        %v587 = vld [vmem:[%s385 + $0x10] sm:$0xff]
        %v588 = vld [vmem:[%s385 + $0x18] sm:$0xff]
        %v589 = vpack.c.bf16 %v586, %v585
        %v590 = vpack.c.bf16 %v588, %v587
        %v591 = vld [vmem:[%s5] sm:$0x3]
        %vm592 = vcmask 31744
        %v594 = vsel %vm592, %v589, 0
        %v597 = vsel %vm592, %v590, 0
        %vm599 = vcmask 1041408
        %v601 = vsel %vm599, %v591, 0
        %603 = vmatpush.bf16.msra.mxu0 0
        %604 = vmatpush.bf16.msra.mxu0 0
        %605 = vmatpush.bf16.msra.mxu0 0
        %606 = vmatpush.bf16.msra.mxu0 0
        %607 = vmatpush.bf16.msra.mxu0 0
        %608 = vmatpush.bf16.msra.mxu0 0
        %609 = vmatpush.bf16.msra.mxu0 0
        %610 = vmatpush.bf16.msra.mxu0 %v601
        %611 = vmatmul.bf16.gmra.mxu0 %v594
        %v612 = vpop.f32.mrf.mxu0
        %v613 = vadd.f32 0.0, %v612
        %v614 = vpop.f32.mrf.mxu0
        %v615 = vadd.f32 0.0, %v614
        %616 = vmatmul.bf16.gmra.mxu0 %v597
        %v617 = vpop.f32.mrf.mxu0
        %v618 = vadd.f32 0.0, %v617
        %v619 = vpop.f32.mrf.mxu0
        %v620 = vadd.f32 0.0, %v619
        %621 = vdwg.mxu0
        %v638 = vunpack.c.l.b16 %v569
        %v639 = vunpack.c.l.b16 %v570
        %v640 = vunpack.c.l.b16 %v571
        %v641 = vunpack.c.l.b16 %v572
        %v642 = vunpack.c.l.b16 %v573
        %v643 = vunpack.c.l.b16 %v574
        %v644 = vunpack.c.l.b16 %v575
        %v645 = vunpack.c.l.b16 %v576
        %v646 = vunpack.c.l.b16 %v577
        %v647 = vunpack.c.l.b16 %v578
        %v648 = vunpack.c.l.b16 %v579
        %v649 = vunpack.c.l.b16 %v580
        %v650 = vunpack.c.l.b16 %v581
        %v651 = vunpack.c.l.b16 %v582
        %v652 = vunpack.c.l.b16 %v583
        %v653 = vunpack.c.l.b16 %v584
        %v654 = vpack.c.b16 %v639, %v638
        %v655 = vpack.c.b16 %v641, %v640
        %v656 = vpack.c.b16 %v643, %v642
        %v657 = vpack.c.b16 %v645, %v644
        %v658 = vpack.c.b16 %v647, %v646
        %v659 = vpack.c.b16 %v649, %v648
        %v660 = vpack.c.b16 %v651, %v650
        %v661 = vpack.c.b16 %v653, %v652
        %670 = vmatpush.bf16.msra.mxu0 %v661
        %671 = vmatpush.bf16.msra.mxu0 %v660
        %672 = vmatpush.bf16.msra.mxu0 %v659
        %673 = vmatpush.bf16.msra.mxu0 %v658
        %674 = vmatpush.bf16.msra.mxu0 %v657
        %675 = vmatpush.bf16.msra.mxu0 %v656
        %676 = vmatpush.bf16.msra.mxu0 %v655
        %677 = vmatpush.bf16.msra.mxu0 %v654
        %678 = vmatmul.bf16.gmra.mxu0 %v567
        %v679 = vpop.f32.mrf.mxu0
        %v680 = vadd.f32 %v613, %v679
        %v681 = vpop.f32.mrf.mxu0
        %v682 = vadd.f32 %v615, %v681
        %683 = vmatmul.bf16.gmra.mxu0 %v568
        %v684 = vpop.f32.mrf.mxu0
        %v685 = vadd.f32 %v618, %v684
        %v686 = vpop.f32.mrf.mxu0
        %v687 = vadd.f32 %v620, %v686
        %688 = vdwg.mxu0
        %v689 = vld [vmem:[%s6] sm:$0x1]
        %v691 = vperm.slane %v689, 0
        %v693 = vadd.f32 %v680, %v691
        %v694 = vadd.f32 %v682, %v691
        %v695 = vadd.f32 %v685, %v691
        %v696 = vadd.f32 %v687, %v691
        %v697 = vmax.f32 %v693, 0.0
        %v698 = vmax.f32 %v694, 0.0
        %v699 = vmax.f32 %v695, 0.0
        %v700 = vmax.f32 %v696, 0.0
        %v701 = vpack.c.bf16 %v698, %v697
        %v702 = vpack.c.bf16 %v700, %v699
        %v703 = vld [vmem:[%s7] sm:$0xf]
        %v704 = vld [vmem:[%s7 + $0x4] sm:$0xf]
        %v705 = vld [vmem:[%s7 + $0x8] sm:$0xf]
        %v706 = vld [vmem:[%s7 + $0xc] sm:$0xf]
        %v707 = vld [vmem:[%s7 + $0x10] sm:$0xf]
        %v708 = vld [vmem:[%s7 + $0x14] sm:$0xf]
        %v709 = vld [vmem:[%s7 + $0x18] sm:$0xf]
        %v710 = vld [vmem:[%s7 + $0x1c] sm:$0xf]
        %v711 = vld [vmem:[%s7 + $0x20] sm:$0xf]
        %v712 = vld [vmem:[%s7 + $0x24] sm:$0xf]
        %v713 = vld [vmem:[%s7 + $0x28] sm:$0xf]
        %v714 = vld [vmem:[%s7 + $0x2c] sm:$0xf]
        %v715 = vld [vmem:[%s7 + $0x30] sm:$0xf]
        %v716 = vld [vmem:[%s7 + $0x34] sm:$0xf]
        %v717 = vld [vmem:[%s7 + $0x38] sm:$0xf]
        %v718 = vld [vmem:[%s7 + $0x3c] sm:$0xf]
        %v719 = vld [vmem:[%s8] sm:$0x1]
        %v721 = vperm.slane %v719, 0
        %v739 = vunpack.c.l.b16 %v703
        %v740 = vunpack.c.l.b16 %v704
        %v741 = vunpack.c.l.b16 %v705
        %v742 = vunpack.c.l.b16 %v706
        %v743 = vunpack.c.l.b16 %v707
        %v744 = vunpack.c.l.b16 %v708
        %v745 = vunpack.c.l.b16 %v709
        %v746 = vunpack.c.l.b16 %v710
        %v747 = vunpack.c.l.b16 %v711
        %v748 = vunpack.c.l.b16 %v712
        %v749 = vunpack.c.l.b16 %v713
        %v750 = vunpack.c.l.b16 %v714
        %v751 = vunpack.c.l.b16 %v715
        %v752 = vunpack.c.l.b16 %v716
        %v753 = vunpack.c.l.b16 %v717
        %v754 = vunpack.c.l.b16 %v718
        %v755 = vpack.c.b16 %v740, %v739
        %v756 = vpack.c.b16 %v742, %v741
        %v757 = vpack.c.b16 %v744, %v743
        %v758 = vpack.c.b16 %v746, %v745
        %v759 = vpack.c.b16 %v748, %v747
        %v760 = vpack.c.b16 %v750, %v749
        %v761 = vpack.c.b16 %v752, %v751
        %v762 = vpack.c.b16 %v754, %v753
        %771 = vmatpush.bf16.msra.mxu0 %v762
        %772 = vmatpush.bf16.msra.mxu0 %v761
        %773 = vmatpush.bf16.msra.mxu0 %v760
        %774 = vmatpush.bf16.msra.mxu0 %v759
        %775 = vmatpush.bf16.msra.mxu0 %v758
        %776 = vmatpush.bf16.msra.mxu0 %v757
        %777 = vmatpush.bf16.msra.mxu0 %v756
        %778 = vmatpush.bf16.msra.mxu0 %v755
        %779 = vmatmul.bf16.gmra.mxu0 %v701
        %v780 = vpop.f32.mrf.mxu0
        %v781 = vadd.f32 %v721, %v780
        %v782 = vpop.f32.mrf.mxu0
        %v783 = vadd.f32 %v721, %v782
        %784 = vmatmul.bf16.gmra.mxu0 %v702
        %v785 = vpop.f32.mrf.mxu0
        %v786 = vadd.f32 %v721, %v785
        %v787 = vpop.f32.mrf.mxu0
        %v788 = vadd.f32 %v721, %v787
        %789 = vdwg.mxu0
        %v790 = vmax.f32 %v781, 0.0
        %v791 = vmax.f32 %v783, 0.0
        %v792 = vmax.f32 %v786, 0.0
        %v793 = vmax.f32 %v788, 0.0
        %v794 = vpack.c.bf16 %v791, %v790
        %v795 = vpack.c.bf16 %v793, %v792
        %v796 = vld [vmem:[#allocation5] sm:$0xf]
        %v797 = vld [vmem:[#allocation5 + $0x4] sm:$0xf]
        %v798 = vld [vmem:[#allocation5 + $0x8] sm:$0xf]
        %v799 = vld [vmem:[#allocation5 + $0xc] sm:$0xf]
        %v800 = vld [vmem:[#allocation5 + $0x10] sm:$0xf]
        %v801 = vld [vmem:[#allocation5 + $0x14] sm:$0xf]
        %v802 = vld [vmem:[#allocation5 + $0x18] sm:$0xf]
        %v803 = vld [vmem:[#allocation5 + $0x1c] sm:$0xf]
        %v804 = vld [vmem:[#allocation5 + $0x20] sm:$0xf]
        %v805 = vld [vmem:[#allocation5 + $0x24] sm:$0xf]
        %v806 = vld [vmem:[#allocation5 + $0x28] sm:$0xf]
        %v807 = vld [vmem:[#allocation5 + $0x2c] sm:$0xf]
        %v808 = vld [vmem:[#allocation5 + $0x30] sm:$0xf]
        %v809 = vld [vmem:[#allocation5 + $0x34] sm:$0xf]
        %v810 = vld [vmem:[#allocation5 + $0x38] sm:$0xf]
        %v811 = vld [vmem:[#allocation5 + $0x3c] sm:$0xf]
        %v812 = vld [vmem:[%s10] sm:$0x1]
        %v814 = vperm.slane %v812, 0
        %v832 = vunpack.c.l.b16 %v796
        %v833 = vunpack.c.l.b16 %v797
        %v834 = vunpack.c.l.b16 %v798
        %v835 = vunpack.c.l.b16 %v799
        %v836 = vunpack.c.l.b16 %v800
        %v837 = vunpack.c.l.b16 %v801
        %v838 = vunpack.c.l.b16 %v802
        %v839 = vunpack.c.l.b16 %v803
        %v840 = vunpack.c.l.b16 %v804
        %v841 = vunpack.c.l.b16 %v805
        %v842 = vunpack.c.l.b16 %v806
        %v843 = vunpack.c.l.b16 %v807
        %v844 = vunpack.c.l.b16 %v808
        %v845 = vunpack.c.l.b16 %v809
        %v846 = vunpack.c.l.b16 %v810
        %v847 = vunpack.c.l.b16 %v811
        %v848 = vpack.c.b16 %v833, %v832
        %v849 = vpack.c.b16 %v835, %v834
        %v850 = vpack.c.b16 %v837, %v836
        %v851 = vpack.c.b16 %v839, %v838
        %v852 = vpack.c.b16 %v841, %v840
        %v853 = vpack.c.b16 %v843, %v842
        %v854 = vpack.c.b16 %v845, %v844
        %v855 = vpack.c.b16 %v847, %v846
        %864 = vmatpush.bf16.msra.mxu0 %v855
        %865 = vmatpush.bf16.msra.mxu0 %v854
        %866 = vmatpush.bf16.msra.mxu0 %v853
        %867 = vmatpush.bf16.msra.mxu0 %v852
        %868 = vmatpush.bf16.msra.mxu0 %v851
        %869 = vmatpush.bf16.msra.mxu0 %v850
        %870 = vmatpush.bf16.msra.mxu0 %v849
        %871 = vmatpush.bf16.msra.mxu0 %v848
        %872 = vmatmul.bf16.gmra.mxu0 %v794
        %v873 = vpop.f32.mrf.mxu0
        %v874 = vadd.f32 %v814, %v873
        %v875 = vpop.f32.mrf.mxu0
        %v876 = vadd.f32 %v814, %v875
        %877 = vmatmul.bf16.gmra.mxu0 %v795
        %v878 = vpop.f32.mrf.mxu0
        %v879 = vadd.f32 %v814, %v878
        %v880 = vpop.f32.mrf.mxu0
        %v881 = vadd.f32 %v814, %v880
        %882 = vdwg.mxu0
        %883 = vst [vmem:[%s374] sm:$0xff] %v874
        %884 = vst [vmem:[%s374 + $0x8] sm:$0xff] %v876
        %885 = vst [vmem:[%s374 + $0x10] sm:$0xff] %v879
        %886 = vst [vmem:[%s374 + $0x18] sm:$0xff] %v881
        %s887 = sand.u32 %s246, 1
        %s888 = scalar_lea.sflag [#allocation7], %s887
        %s889 = sand.u32 %s246, 1
        %s890 = smul.addr %s889, 32
        %s891 = scalar_lea.vmem [#allocation8], %s890
        // Predicated region
        $region61: #{tpu_custom_call.1} parent=55 // pred_check
          %p892 = pneg %p256
        $region62: #{tpu_custom_call.1} parent=55 // pred_check_branch
          %894 = sbr.rel (%p892) target = $region64
        $region63: #{tpu_custom_call.1} parent=55 // pred_region
          %s895 = smul.u32 4, %s39
          %897 = vsyncadd %s888, 0
          %s898 = smul.addr %s895, 8
          %s899 = scalar_lea.hbm %s11, %s898
          %s900 = sshll.u32 %s891, 4
          %s901 = int_to_ptr.vmem [resolvable:$true] %s900
          %s902 = sshll.u32 %s899, 4
          %s903 = int_to_ptr.hbm [resolvable:$true] %s902
          %908 = dma.vmem_to_hbm [thread:$0]  %s901, 512, %s903, %s888, 128, 128, 8
        $region64: #{tpu_custom_call.1} parent=55 // pred_fallthru
          _
      $region56: #{tpu_custom_call.1} parent=5 // pred_fallthru
        _
      %p909 = scmp.le.s32.totalorder 2, %s34
      // Predicated region
      $region65: #{tpu_custom_call.1} parent=5 // pred_check
        %p910 = pneg %p909
      $region66: #{tpu_custom_call.1} parent=5 // pred_check_branch
        %912 = sbr.rel (%p910) target = $region68
      $region67: #{tpu_custom_call.1} parent=5 // pred_region
        %s913 = ssub.s32 %s34, 2
        // Predicated region
        $region69: #{tpu_custom_call.1} parent=67 // pred_check
          %p914 = pneg %p262
        $region70: #{tpu_custom_call.1} parent=67 // pred_check_branch
          %916 = sbr.rel (%p914) target = $region72
        $region71: #{tpu_custom_call.1} parent=67 // pred_region
          %s917 = sand.u32 %s247, 1
          %s918 = scalar_lea.sflag [#allocation7], %s917
          %s919 = sand.u32 %s247, 1
          %s920 = smul.addr %s919, 32
          %s921 = scalar_lea.vmem [#allocation8], %s920
          %923 = dma.done %s918, 512
        $region72: #{tpu_custom_call.1} parent=67 // pred_fallthru
          _
      $region68: #{tpu_custom_call.1} parent=5 // pred_fallthru
        _
    $region6: #{tpu_custom_call.1} parent=1 // loop_footer
      %s38 = sadd.s32 1, %s34
    $region7: #{tpu_custom_call.1} parent=1 // loop_footer_branch
      %33 = sbr.rel target = $region3
    $region8: #{tpu_custom_call.1} parent=1 // loop_exit
      _
    %924 = vsyncpa [#allocation6], 1
    %s925 = scalar_lea.sflag [#allocation6], 1
    %926 = vsyncpa %s925, 1
    %927 = vsyncpa [#allocation7], 1
    %s928 = scalar_lea.sflag [#allocation7], 1
    %929 = vsyncpa %s928, 1

</llo_original>
